<compile_context>
chip_gen: v5e
topology: v5e:2x2
jax: 0.10.0
libtpu: 0.0.40
codegen_flags: <defaults>
</compile_context>

<pallas_src>
import jax
import jax.numpy as jnp
from jax.experimental import pallas as pl
from jax.experimental.pallas import tpu as pltpu

LANES = 128
DEFAULT_TILE_ROWS = 2048  # 2048 x 128 f32 = 1 MiB input / 2 MiB output per step


def _round_up(a, m):
    return ((a + m - 1) // m) * m


def _cdiv(a, b):
    return (a + b - 1) // b


def _linear_kernel(w_ref, b_ref, x_ref, o_ref):
    # w_ref: SMEM f32[out_f]            (flattened Linear weight, in_features == 1)
    # b_ref: SMEM f32[out_f]
    # x_ref: VMEM f32[tr, 128]          (lane-dense batch slab tile)
    # o_ref: VMEM f32[out_f, tr, 128]   (one full-lane plane per output feature)
    x = x_ref[...]
    for j in range(o_ref.shape[0]):           # out_f (= 2) is static
        o_ref[j] = x * w_ref[j] + b_ref[j]    # scalar broadcast on the VPU


def classifier_forward(x, weight, bias, *, tile_rows=DEFAULT_TILE_ROWS,
                       feature_major=False):
    """Equivalent of torch.nn.Linear(1, 2): y = x @ weight.T + bias.

    Args:
      x:      [B, 1] float32
      weight: [2, 1] float32 (PyTorch layout: [out_features, in_features])
      bias:   [2]    float32
      feature_major: if True, return [2, B] (skips the final transpose pass).
    Returns:
      [B, 2] float32 (or [2, B] if feature_major=True).
    """
    B, in_f = x.shape
    out_f, w_in = weight.shape
    assert in_f == 1 and w_in == 1, "Classifier is Linear(1, 2)"
    assert bias.shape == (out_f,)

    # --- lane-dense relayout of the batch --------------------------------
    rows = _cdiv(B, LANES)
    Bp = rows * LANES
    xf = x.reshape(B).astype(jnp.float32)
    if Bp != B:
        # Ragged batch only: pad to the next multiple of 128 (one extra pass
        # over x). B % 128 == 0 takes the free-reshape path with no copy.
        xf = jnp.pad(xf, (0, Bp - B))
    x2d = xf.reshape(rows, LANES)                     # [rows, 128] lane-dense

    # --- adaptive tiling ---------------------------------------------------
    num_tiles = _cdiv(rows, tile_rows)
    if num_tiles == 1 and rows >= 16:
        num_tiles = 2                 # let v7x shard "parallel" axis over 2 TCs
    if num_tiles == 1:
        tr = rows                     # single full-extent block, always legal
    else:
        tr = _round_up(_cdiv(rows, num_tiles), 8)     # keep (8,128)-legal tiles
        num_tiles = _cdiv(rows, tr)   # last block may be partial (masked)

    w_flat = weight.reshape(out_f).astype(jnp.float32)   # SMEM scalars
    b_flat = bias.reshape(out_f).astype(jnp.float32)     # SMEM scalars

    cost = pl.CostEstimate(
        flops=2 * out_f * Bp,                      # one mul + one add per output
        transcendentals=0,
        bytes_accessed=4 * Bp + 4 * out_f * Bp,    # read x + write y (HBM-bound)
    )

    out_slab = pl.pallas_call(
        _linear_kernel,
        out_shape=jax.ShapeDtypeStruct((out_f, rows, LANES), jnp.float32),
        grid=(num_tiles,),
        in_specs=[
            pl.BlockSpec(memory_space=pltpu.MemorySpace.SMEM),   # weight
            pl.BlockSpec(memory_space=pltpu.MemorySpace.SMEM),   # bias
            pl.BlockSpec((tr, LANES), lambda i: (i, 0)),         # x slab tile
        ],
        out_specs=pl.BlockSpec((out_f, tr, LANES), lambda i: (0, i, 0)),
        compiler_params=pltpu.CompilerParams(
            dimension_semantics=("parallel",)),
        cost_estimate=cost,
    )(w_flat, b_flat, x2d)

    out_fm = out_slab.reshape(out_f, Bp)[:, :B]    # [2, B], feature-major
    if feature_major:
        return out_fm
    # Separate XLA pass: slice+transpose to the [B, 2] nn.Linear layout.
    return out_fm.T


if __name__ == "__main__":
    key = jax.random.PRNGKey(0)
    k_x, k_w, k_b = jax.random.split(key, 3)

    # Small shapes implied by Linear(1, 2): last dim = 1.
    B = 8
    x = jax.random.normal(k_x, (B, 1), dtype=jnp.float32)
    weight = jax.random.uniform(k_w, (2, 1), dtype=jnp.float32,
                                minval=-1.0, maxval=1.0)
    bias = jax.random.uniform(k_b, (2,), dtype=jnp.float32,
                              minval=-1.0, maxval=1.0)

    out = jax.block_until_ready(classifier_forward(x, weight, bias))
    ref = x @ weight.T + bias
    assert out.shape == (B, 2)
    assert jnp.allclose(out, ref, atol=1e-5, rtol=1e-5)

    # Feature-major fast path (no transpose pass).
    out_fm = jax.block_until_ready(
        classifier_forward(x, weight, bias, feature_major=True))
    assert out_fm.shape == (2, B)
    assert jnp.allclose(out_fm.T, ref, atol=1e-5, rtol=1e-5)

    # Multi-tile grid + ragged batch + partial boundary block path:
    # rows = 2051 -> 2 tiles of 1032 rows, last block partial, batch tail padded.
    B2 = 2048 * 128 + 300
    x2 = jax.random.normal(k_x, (B2, 1), dtype=jnp.float32)
    out2 = jax.block_until_ready(classifier_forward(x2, weight, bias))
    ref2 = x2 @ weight.T + bias
    assert out2.shape == (B2, 2)
    assert jnp.allclose(out2, ref2, atol=1e-5, rtol=1e-5)

    print("KERNEL_OK")
</pallas_src>

<mosaic_0001>
module attributes {stable_mosaic.version = 11 : i64} {
  func.func @_linear_kernel(%arg0: i32, %arg1: memref<2xf32, #tpu.memory_space<smem>>, %arg2: memref<2xf32, #tpu.memory_space<smem>>, %arg3: memref<1x128xf32, #tpu.memory_space<vmem>>, %arg4: memref<2x1x128xf32, #tpu.memory_space<vmem>>) attributes {dimension_semantics = [#tpu.dimension_semantics<parallel>], iteration_bounds = array<i64: 1>, scalar_prefetch = 0 : i64, scratch_operands = 0 : i64, tpu.core_type = #tpu.core_type<tc>, window_params = [{transform_indices = @transform_0, window_bounds = array<i64: 2>}, {transform_indices = @transform_1, window_bounds = array<i64: 2>}, {transform_indices = @transform_2, window_bounds = array<i64: 1, 128>}, {transform_indices = @transform_3, window_bounds = array<i64: 2, 1, 128>}]} {
    %c0 = arith.constant 0 : index
    %c0_0 = arith.constant 0 : index
    %0 = vector.load %arg3[%c0, %c0_0] : memref<1x128xf32, #tpu.memory_space<vmem>>, vector<1x128xf32>
    %c0_1 = arith.constant 0 : index
    %1 = memref.load %arg1[%c0_1] : memref<2xf32, #tpu.memory_space<smem>>
    %2 = vector.broadcast %1 : f32 to vector<1x128xf32>
    %3 = arith.mulf %0, %2 : vector<1x128xf32>
    %c0_2 = arith.constant 0 : index
    %4 = memref.load %arg2[%c0_2] : memref<2xf32, #tpu.memory_space<smem>>
    %5 = vector.broadcast %4 : f32 to vector<1x128xf32>
    %6 = arith.addf %3, %5 : vector<1x128xf32>
    %c0_3 = arith.constant 0 : index
    %c0_4 = arith.constant 0 : index
    %c0_5 = arith.constant 0 : index
    %7 = vector.load %arg4[%c0_3, %c0_4, %c0_5] : memref<2x1x128xf32, #tpu.memory_space<vmem>>, vector<1x1x128xf32>
    %8 = vector.shape_cast %7 : vector<1x1x128xf32> to vector<1x128xf32>
    %9 = vector.shape_cast %6 : vector<1x128xf32> to vector<1x1x128xf32>
    tpu.vector_store %arg4[%c0_3, %c0_4, %c0_5], %9 {strides = array<i32>} : memref<2x1x128xf32, #tpu.memory_space<vmem>>, vector<1x1x128xf32>,
    %c1 = arith.constant 1 : index
    %10 = memref.load %arg1[%c1] : memref<2xf32, #tpu.memory_space<smem>>
    %11 = vector.broadcast %10 : f32 to vector<1x128xf32>
    %12 = arith.mulf %0, %11 : vector<1x128xf32>
    %c1_6 = arith.constant 1 : index
    %13 = memref.load %arg2[%c1_6] : memref<2xf32, #tpu.memory_space<smem>>
    %14 = vector.broadcast %13 : f32 to vector<1x128xf32>
    %15 = arith.addf %12, %14 : vector<1x128xf32>
    %c1_7 = arith.constant 1 : index
    %c0_8 = arith.constant 0 : index
    %c0_9 = arith.constant 0 : index
    %16 = vector.load %arg4[%c1_7, %c0_8, %c0_9] : memref<2x1x128xf32, #tpu.memory_space<vmem>>, vector<1x1x128xf32>
    %17 = vector.shape_cast %16 : vector<1x1x128xf32> to vector<1x128xf32>
    %18 = vector.shape_cast %15 : vector<1x128xf32> to vector<1x1x128xf32>
    tpu.vector_store %arg4[%c1_7, %c0_8, %c0_9], %18 {strides = array<i32>} : memref<2x1x128xf32, #tpu.memory_space<vmem>>, vector<1x1x128xf32>,
    return
  }
  func.func @transform_0(%arg0: i32) -> i32 {
    %c0_i32 = arith.constant 0 : i32
    %c0_i32_0 = arith.constant 0 : i32
    return %c0_i32 : i32
  }
  func.func @transform_1(%arg0: i32) -> i32 {
    %c0_i32 = arith.constant 0 : i32
    %c0_i32_0 = arith.constant 0 : i32
    return %c0_i32 : i32
  }
  func.func @transform_2(%arg0: i32) -> (i32, i32) {
    %c0_i32 = arith.constant 0 : i32
    %c0_i32_0 = arith.constant 0 : i32
    return %arg0, %c0_i32 : i32, i32
  }
  func.func @transform_3(%arg0: i32) -> (i32, i32, i32) {
    %c0_i32 = arith.constant 0 : i32
    %c0_i32_0 = arith.constant 0 : i32
    %c0_i32_1 = arith.constant 0 : i32
    return %c0_i32, %arg0, %c0_i32_0 : i32, i32, i32
  }
}

</mosaic_0001>

<llo_original>
// kernel: tpu_custom_call.1
$region0: #{tpu_custom_call.1}
  #allocation0 [shape = 'u32[]', space=smem, size = 0x4, offset = 0x4, fixed_abs, tag = 'smem constant byte address 0x4 - core index']
  #allocation1 [shape = 'u32[72,128]{1,0:T(1,128)}', space=vmem, size = 0x9000, scoped, tag = 'internal scratch']
  %s0 = inlined_call_operand.hbm [shape: f32[2], index: 0, kind: input, shape index: {}]
  %s1 = inlined_call_operand.hbm [shape: f32[2], index: 1, kind: input, shape index: {}]
  %s2 = inlined_call_operand.vmem [shape: f32[1,128], index: 2, kind: input, shape index: {}]
  %s3 = inlined_call_operand.hbm [shape: f32[2,1,128], index: 3, kind: output, shape index: {}]
  %s4 = sld [smem:[#allocation0]]
  $region30: #{tpu_custom_call.1} parent=0
    _
  %s6 = ssub.s32 1, %s4
  %s7 = scalar_select 0, %s6, %s4
  $region1: #{tpu_custom_call.1} parent=0
    #allocation2 [shape = 'u8[512]{0}', space=smem, size = 0x200, scoped, tag = 'input window, operand 0, single buffered']
    #allocation3 [shape = 's32[1]{0}', space=sflag, size = 0x4, scoped, tag = 'scoped memory for tpu_custom_call.1']
    #allocation4 [shape = 's32[1]{0}', space=sflag, size = 0x4, scoped, tag = 'scoped memory for tpu_custom_call.1']
    #allocation5 [shape = 'u8[512]{0}', space=smem, size = 0x200, scoped, tag = 'input window, operand 1, single buffered']
    #allocation6 [shape = 's32[1]{0}', space=sflag, size = 0x4, scoped, tag = 'scoped memory for tpu_custom_call.1']
    #allocation7 [shape = 'u8[1024]{0}', space=vmem, size = 0x400, scoped, tag = 'output window, operand 0, single buffered']
    %8 = vsyncpa [#allocation4], 0
    %9 = vsyncpa [#allocation6], 0
    %10 = vsyncpa [#allocation3], 0
    // Predicated region
    $region2: #{tpu_custom_call.1} parent=1 // pred_check
      _
    $region3: #{tpu_custom_call.1} parent=1 // pred_check_branch
      %12 = sbr.rel (0) target = $region5
    $region4: #{tpu_custom_call.1} parent=1 // pred_region
      %14 = vsyncadd [#allocation4], 0
      %s16 = sshll.u32 %s0, 4
      %s17 = int_to_ptr.hbm [resolvable:$true] %s16
      %19 = dma.hbm_to_smem %s17, 16, [#allocation2], [#allocation4]
    $region5: #{tpu_custom_call.1} parent=1 // pred_fallthru
      _
    // Predicated region
    $region6: #{tpu_custom_call.1} parent=1 // pred_check
      _
    $region7: #{tpu_custom_call.1} parent=1 // pred_check_branch
      %21 = sbr.rel (0) target = $region9
    $region8: #{tpu_custom_call.1} parent=1 // pred_region
      %23 = vsyncadd [#allocation6], 0
      %s25 = sshll.u32 %s1, 4
      %s26 = int_to_ptr.hbm [resolvable:$true] %s25
      %28 = dma.hbm_to_smem %s26, 16, [#allocation5], [#allocation6]
    $region9: #{tpu_custom_call.1} parent=1 // pred_fallthru
      _
    // Predicated region
    $region10: #{tpu_custom_call.1} parent=1 // pred_check
      _
    $region11: #{tpu_custom_call.1} parent=1 // pred_check_branch
      %30 = sbr.rel (0) target = $region13
    $region12: #{tpu_custom_call.1} parent=1 // pred_region
      _
    $region13: #{tpu_custom_call.1} parent=1 // pred_fallthru
      _
    // Predicated region
    $region14: #{tpu_custom_call.1} parent=1 // pred_check
      _
    $region15: #{tpu_custom_call.1} parent=1 // pred_check_branch
      %32 = sbr.rel (0) target = $region17
    $region16: #{tpu_custom_call.1} parent=1 // pred_region
      %34 = dma.done [#allocation4], 16
    $region17: #{tpu_custom_call.1} parent=1 // pred_fallthru
      _
    // Predicated region
    $region18: #{tpu_custom_call.1} parent=1 // pred_check
      _
    $region19: #{tpu_custom_call.1} parent=1 // pred_check_branch
      %36 = sbr.rel (0) target = $region21
    $region20: #{tpu_custom_call.1} parent=1 // pred_region
      %38 = dma.done [#allocation6], 16
    $region21: #{tpu_custom_call.1} parent=1 // pred_fallthru
      _
    %39 = sfence
    %v40 = vld [vmem:[%s2] sm:$0x1]
    %s41 = sld [smem:[#allocation2]]
    %v42 = vstv %s41
    %v43 = vmul.f32 %v40, %v42
    %s44 = sld [smem:[#allocation5]]
    %v45 = vstv %s44
    %v46 = vadd.f32 %v43, %v45
    %47 = vst [vmem:[#allocation7] sm:$0x1] %v46
    %s48 = sld [smem:[#allocation2 + $0x1]]
    %v49 = vstv %s48
    %v50 = vmul.f32 %v40, %v49
    %s51 = sld [smem:[#allocation5 + $0x1]]
    %v52 = vstv %s51
    %v53 = vadd.f32 %v50, %v52
    %s54 = scalar_lea.vmem [#allocation7], 1
    %55 = vst [vmem:[%s54] sm:$0x1] %v53
    // Predicated region
    $region22: #{tpu_custom_call.1} parent=1 // pred_check
      _
    $region23: #{tpu_custom_call.1} parent=1 // pred_check_branch
      %57 = sbr.rel (0) target = $region25
    $region24: #{tpu_custom_call.1} parent=1 // pred_region
      %59 = vsyncadd [#allocation3], 0
      %s60 = sshll.u32 [#allocation7], 4
      %s61 = int_to_ptr.vmem [resolvable:$true] %s60
      %s62 = sshll.u32 %s3, 4
      %s63 = int_to_ptr.hbm [resolvable:$true] %s62
      %68 = dma.vmem_to_hbm [thread:$0]  %s61, 32, %s63, [#allocation3], 16, 16, 1
    $region25: #{tpu_custom_call.1} parent=1 // pred_fallthru
      _
    // Predicated region
    $region26: #{tpu_custom_call.1} parent=1 // pred_check
      _
    $region27: #{tpu_custom_call.1} parent=1 // pred_check_branch
      %70 = sbr.rel (0) target = $region29
    $region28: #{tpu_custom_call.1} parent=1 // pred_region
      %72 = dma.done [#allocation3], 32
    $region29: #{tpu_custom_call.1} parent=1 // pred_fallthru
      _
    %73 = vsyncpa [#allocation3], 1
    %74 = vsyncpa [#allocation4], 1
    %75 = vsyncpa [#allocation6], 1

</llo_original>
